<compile_context>
chip_gen: v7x
topology: tpu7x:2x2x1
jax: 0.10.0
libtpu: 0.0.40
codegen_flags: <defaults>
</compile_context>

<pallas_src>
import jax
import jax.numpy as jnp
from jax.experimental import pallas as pl
from jax.experimental.pallas import tpu as pltpu


# ------------------------------- helpers --------------------------------------
def _round_up(x, m):
    return (x + m - 1) // m * m


def _vmem_budget():
    """Returns (per-step tile budget bytes, vmem_limit_bytes) per TPU generation."""
    try:
        phys = pltpu.get_tpu_info().vmem_capacity_bytes
    except Exception:
        phys = 64 * 1024 * 1024
    if phys >= 96 * 1024 * 1024:                  # v5e / v6e: 128 MiB physical VMEM
        return 24 * 1024 * 1024, 64 * 1024 * 1024
    return 12 * 1024 * 1024, 32 * 1024 * 1024     # v7x: 64 MiB physical VMEM


def _sub_rows(cout):
    """Sub-block height (sublane rows) so K accumulators + 1 x-slab stay in vregs."""
    return max(8, min(64, ((384 // (cout + 1)) // 8) * 8))


def _pick_rows_tile(S, n_batch, cin, cout, itemsize, budget_bytes):
    """Pixel-row tile (in units of 128-pixel rows) for the dense VPU path."""
    if S <= 8:
        return S
    cap_rows = _sub_rows(cout) * 8                # bounds in-kernel unroll to <= ~8 sub-blocks
    fit_rows = budget_bytes // (2 * (cin + cout) * 128 * itemsize)
    st = max(8, min(cap_rows, (fit_rows // 8) * 8))
    if st >= S:
        if n_batch == 1:
            st = max(8, _round_up(-(-S // 2), 8))  # >= 2 pixel tiles for v7x's two TCs
        else:
            st = S                                 # full extent: no partial block at all
    return st


def _pick_pixel_tile_mxu(HW, n_batch, cin, cout, itemsize, budget_bytes):
    """Pixel tile (lanes) for the MXU path; multiple of 128 or the full extent."""
    cap = 16384
    fit = budget_bytes // (2 * (cin + cout) * itemsize)
    tm = max(128, min(cap, (fit // 128) * 128))
    if tm >= HW:
        if n_batch == 1 and HW > 128:
            tm = max(128, _round_up(-(-HW // 2), 128))  # keep >= 2 tiles for v7x
        else:
            tm = HW                                      # full extent (any HW allowed)
    return tm


# ----------------------------- Pallas kernels ---------------------------------
def _outconv_vpu_kernel(x_ref, w_ref, b_ref, o_ref):
    """Dense small-channel path.

    x_ref: (C, S_t, 128) VMEM   pixel tile, pixels on sublanes AND lanes
    w_ref: (K, C)        SMEM   scalar weights
    b_ref: (K,)          SMEM   scalar bias
    o_ref: (K, S_t, 128) VMEM   output tile (dense stores)
    """
    cin, s_rows, _ = x_ref.shape
    cout = o_ref.shape[0]
    sb = min(s_rows, _sub_rows(cout))

    start = 0
    while start < s_rows:                         # static Python loop (bounded unroll)
        size = min(sb, s_rows - start)
        sl = slice(start, start + size)
        # Load each input-channel slab once; feed K register-resident accumulators.
        x0 = x_ref[0, sl, :].astype(jnp.float32)
        accs = [w_ref[k, 0] * x0 + b_ref[k] for k in range(cout)]   # bias folded in
        for c in range(1, cin):
            xc = x_ref[c, sl, :].astype(jnp.float32)
            for k in range(cout):
                accs[k] = accs[k] + w_ref[k, c] * xc
        for k in range(cout):
            o_ref[k, sl, :] = accs[k].astype(o_ref.dtype)           # dense store
        start += size


def _outconv_mxu_kernel(x_ref, w_ref, b_ref, o_ref):
    """Large-channel / unaligned-HW path: (K, C) @ (C, tm) on the MXU.

    x_ref: (C, tm) VMEM, w_ref: (K, C) VMEM, b_ref: (K, 1) VMEM, o_ref: (K, tm)
    """
    x = x_ref[...]
    if x.dtype != jnp.float32:
        x = x.astype(jnp.float32)
    acc = jnp.dot(w_ref[...], x, preferred_element_type=jnp.float32)
    o_ref[...] = (acc + b_ref[...]).astype(o_ref.dtype)


# ------------------------------ conv wrapper ----------------------------------
def conv1x1_nchw(x, weight, bias):
    """1x1 conv on NCHW input. weight: (K, C) (PyTorch OIHW squeezed), bias: (K,)."""
    N, C, H, W = x.shape
    K = weight.shape[0]
    HW = H * W
    itemsize = jnp.dtype(x.dtype).itemsize
    budget, vmem_limit = _vmem_budget()

    cost = pl.CostEstimate(
        flops=2 * N * HW * C * K,
        transcendentals=0,
        bytes_accessed=itemsize * N * (C + K) * HW + 4 * (K * C + K),
    )
    cparams = pltpu.CompilerParams(
        dimension_semantics=("parallel", "parallel"),
        vmem_limit_bytes=vmem_limit,
    )

    if (HW % 128 == 0) and (K <= 8) and (C <= 32):
        # Dense VPU path: pixels on sublanes AND lanes, SMEM scalar params.
        S = HW // 128
        s_t = _pick_rows_tile(S, N, C, K, itemsize, budget)
        grid = (N, pl.cdiv(S, s_t))
        out = pl.pallas_call(
            _outconv_vpu_kernel,
            out_shape=jax.ShapeDtypeStruct((N, K, S, 128), x.dtype),
            grid=grid,
            in_specs=[
                pl.BlockSpec((None, C, s_t, 128), lambda n, t: (n, 0, t, 0)),
                pl.BlockSpec(memory_space=pltpu.MemorySpace.SMEM),
                pl.BlockSpec(memory_space=pltpu.MemorySpace.SMEM),
            ],
            out_specs=pl.BlockSpec((None, K, s_t, 128), lambda n, t: (n, 0, t, 0)),
            compiler_params=cparams,
            cost_estimate=cost,
        )(x.reshape(N, C, S, 128), weight, bias)
        return out.reshape(N, K, H, W)

    # MXU path (larger channels, or HW not a multiple of 128).  No input padding:
    # partial boundary blocks handle the tail, output is written at exact size.
    tm = _pick_pixel_tile_mxu(HW, N, C, K, itemsize, budget)
    grid = (N, pl.cdiv(HW, tm))
    out = pl.pallas_call(
        _outconv_mxu_kernel,
        out_shape=jax.ShapeDtypeStruct((N, K, HW), x.dtype),
        grid=grid,
        in_specs=[
            pl.BlockSpec((None, C, tm), lambda n, t: (n, 0, t)),
            pl.BlockSpec((K, C), lambda n, t: (0, 0)),
            pl.BlockSpec((K, 1), lambda n, t: (0, 0)),
        ],
        out_specs=pl.BlockSpec((None, K, tm), lambda n, t: (n, 0, t)),
        compiler_params=cparams,
        cost_estimate=cost,
    )(x.reshape(N, C, HW), weight, bias.reshape(K, 1))
    return out.reshape(N, K, H, W)


# ------------------------------ Module wrapper --------------------------------
class OutConvPallas:
    """JAX/Pallas equivalent of OutConv = nn.Conv2d(in_channels, out_channels, 1)."""

    def __init__(self, in_channels, out_channels, key):
        self.in_channels = in_channels
        self.out_channels = out_channels
        kw, kb = jax.random.split(key)
        # Matches PyTorch Conv2d default init (kernel_size=1 -> fan_in = in_channels).
        bound = 1.0 / (in_channels ** 0.5)
        # PyTorch weight is (out, in, 1, 1); stored squeezed as (out, in).
        self.weight = jax.random.uniform(
            kw, (out_channels, in_channels), jnp.float32, -bound, bound)
        self.bias = jax.random.uniform(
            kb, (out_channels,), jnp.float32, -bound, bound)

    def __call__(self, x):
        return conv1x1_nchw(x, self.weight, self.bias)


# ---------------------------------- main ---------------------------------------
if __name__ == "__main__":
    key = jax.random.PRNGKey(0)
    k_net, k_x = jax.random.split(key)

    # Primary test (dense VPU path): matches the OutConv spec at small shapes.
    N, C, H, W = 2, 4, 16, 16
    n_classes = 3
    model = OutConvPallas(in_channels=C, out_channels=n_classes, key=k_net)
    x = jax.random.normal(k_x, (N, C, H, W), jnp.float32)

    out = model(x)
    jax.block_until_ready(out)

    ref = (jnp.einsum("nchw,kc->nkhw", x, model.weight)
           + model.bias.reshape(1, n_classes, 1, 1))
    assert out.shape == (N, n_classes, H, W)
    assert jnp.allclose(out, ref, atol=1e-5, rtol=1e-5)

    # Secondary test: exercise the MXU (larger-channel) path once.
    C2, K2 = 48, 2
    model2 = OutConvPallas(in_channels=C2, out_channels=K2,
                           key=jax.random.fold_in(k_net, 1))
    x2 = jax.random.normal(jax.random.fold_in(k_x, 1), (2, C2, 16, 16), jnp.float32)
    out2 = model2(x2)
    jax.block_until_ready(out2)
    ref2 = (jnp.einsum("nchw,kc->nkhw", x2, model2.weight)
            + model2.bias.reshape(1, K2, 1, 1))
    assert jnp.allclose(out2, ref2, atol=1e-4, rtol=1e-4)

    print("KERNEL_OK")
</pallas_src>

<mosaic_0001>
module attributes {stable_mosaic.version = 11 : i64} {
  func.func @_outconv_vpu_kernel(%arg0: i32, %arg1: i32, %arg2: memref<1x4x2x128xf32, #tpu.memory_space<vmem>>, %arg3: memref<3x4xf32, #tpu.memory_space<smem>>, %arg4: memref<3xf32, #tpu.memory_space<smem>>, %arg5: memref<1x3x2x128xf32, #tpu.memory_space<vmem>>) attributes {dimension_semantics = [#tpu.dimension_semantics<parallel>, #tpu.dimension_semantics<parallel>], iteration_bounds = array<i64: 2, 1>, scalar_prefetch = 0 : i64, scratch_operands = 0 : i64, tpu.core_type = #tpu.core_type<tc>, window_params = [{transform_indices = @transform_0, window_bounds = array<i64: 1, 4, 2, 128>}, {transform_indices = @transform_1, window_bounds = array<i64: 3, 4>}, {transform_indices = @transform_2, window_bounds = array<i64: 3>}, {transform_indices = @transform_3, window_bounds = array<i64: 1, 3, 2, 128>}]} {
    %c0 = arith.constant 0 : index
    %c0_0 = arith.constant 0 : index
    %c0_1 = arith.constant 0 : index
    %c0_2 = arith.constant 0 : index
    %0 = vector.load %arg2[%c0, %c0_0, %c0_1, %c0_2] : memref<1x4x2x128xf32, #tpu.memory_space<vmem>>, vector<1x1x2x128xf32>
    %1 = vector.shape_cast %0 : vector<1x1x2x128xf32> to vector<2x128xf32>
    %c0_3 = arith.constant 0 : index
    %c0_4 = arith.constant 0 : index
    %2 = memref.load %arg3[%c0_3, %c0_4] : memref<3x4xf32, #tpu.memory_space<smem>>
    %3 = vector.broadcast %2 : f32 to vector<2x128xf32>
    %4 = arith.mulf %3, %1 : vector<2x128xf32>
    %c0_5 = arith.constant 0 : index
    %5 = memref.load %arg4[%c0_5] : memref<3xf32, #tpu.memory_space<smem>>
    %6 = vector.broadcast %5 : f32 to vector<2x128xf32>
    %7 = arith.addf %4, %6 : vector<2x128xf32>
    %c1 = arith.constant 1 : index
    %c0_6 = arith.constant 0 : index
    %8 = memref.load %arg3[%c1, %c0_6] : memref<3x4xf32, #tpu.memory_space<smem>>
    %9 = vector.broadcast %8 : f32 to vector<2x128xf32>
    %10 = arith.mulf %9, %1 : vector<2x128xf32>
    %c1_7 = arith.constant 1 : index
    %11 = memref.load %arg4[%c1_7] : memref<3xf32, #tpu.memory_space<smem>>
    %12 = vector.broadcast %11 : f32 to vector<2x128xf32>
    %13 = arith.addf %10, %12 : vector<2x128xf32>
    %c2 = arith.constant 2 : index
    %c0_8 = arith.constant 0 : index
    %14 = memref.load %arg3[%c2, %c0_8] : memref<3x4xf32, #tpu.memory_space<smem>>
    %15 = vector.broadcast %14 : f32 to vector<2x128xf32>
    %16 = arith.mulf %15, %1 : vector<2x128xf32>
    %c2_9 = arith.constant 2 : index
    %17 = memref.load %arg4[%c2_9] : memref<3xf32, #tpu.memory_space<smem>>
    %18 = vector.broadcast %17 : f32 to vector<2x128xf32>
    %19 = arith.addf %16, %18 : vector<2x128xf32>
    %c0_10 = arith.constant 0 : index
    %c1_11 = arith.constant 1 : index
    %c0_12 = arith.constant 0 : index
    %c0_13 = arith.constant 0 : index
    %20 = vector.load %arg2[%c0_10, %c1_11, %c0_12, %c0_13] : memref<1x4x2x128xf32, #tpu.memory_space<vmem>>, vector<1x1x2x128xf32>
    %21 = vector.shape_cast %20 : vector<1x1x2x128xf32> to vector<2x128xf32>
    %c0_14 = arith.constant 0 : index
    %c1_15 = arith.constant 1 : index
    %22 = memref.load %arg3[%c0_14, %c1_15] : memref<3x4xf32, #tpu.memory_space<smem>>
    %23 = vector.broadcast %22 : f32 to vector<2x128xf32>
    %24 = arith.mulf %23, %21 : vector<2x128xf32>
    %25 = arith.addf %7, %24 : vector<2x128xf32>
    %c1_16 = arith.constant 1 : index
    %c1_17 = arith.constant 1 : index
    %26 = memref.load %arg3[%c1_16, %c1_17] : memref<3x4xf32, #tpu.memory_space<smem>>
    %27 = vector.broadcast %26 : f32 to vector<2x128xf32>
    %28 = arith.mulf %27, %21 : vector<2x128xf32>
    %29 = arith.addf %13, %28 : vector<2x128xf32>
    %c2_18 = arith.constant 2 : index
    %c1_19 = arith.constant 1 : index
    %30 = memref.load %arg3[%c2_18, %c1_19] : memref<3x4xf32, #tpu.memory_space<smem>>
    %31 = vector.broadcast %30 : f32 to vector<2x128xf32>
    %32 = arith.mulf %31, %21 : vector<2x128xf32>
    %33 = arith.addf %19, %32 : vector<2x128xf32>
    %c0_20 = arith.constant 0 : index
    %c2_21 = arith.constant 2 : index
    %c0_22 = arith.constant 0 : index
    %c0_23 = arith.constant 0 : index
    %34 = vector.load %arg2[%c0_20, %c2_21, %c0_22, %c0_23] : memref<1x4x2x128xf32, #tpu.memory_space<vmem>>, vector<1x1x2x128xf32>
    %35 = vector.shape_cast %34 : vector<1x1x2x128xf32> to vector<2x128xf32>
    %c0_24 = arith.constant 0 : index
    %c2_25 = arith.constant 2 : index
    %36 = memref.load %arg3[%c0_24, %c2_25] : memref<3x4xf32, #tpu.memory_space<smem>>
    %37 = vector.broadcast %36 : f32 to vector<2x128xf32>
    %38 = arith.mulf %37, %35 : vector<2x128xf32>
    %39 = arith.addf %25, %38 : vector<2x128xf32>
    %c1_26 = arith.constant 1 : index
    %c2_27 = arith.constant 2 : index
    %40 = memref.load %arg3[%c1_26, %c2_27] : memref<3x4xf32, #tpu.memory_space<smem>>
    %41 = vector.broadcast %40 : f32 to vector<2x128xf32>
    %42 = arith.mulf %41, %35 : vector<2x128xf32>
    %43 = arith.addf %29, %42 : vector<2x128xf32>
    %c2_28 = arith.constant 2 : index
    %c2_29 = arith.constant 2 : index
    %44 = memref.load %arg3[%c2_28, %c2_29] : memref<3x4xf32, #tpu.memory_space<smem>>
    %45 = vector.broadcast %44 : f32 to vector<2x128xf32>
    %46 = arith.mulf %45, %35 : vector<2x128xf32>
    %47 = arith.addf %33, %46 : vector<2x128xf32>
    %c0_30 = arith.constant 0 : index
    %c3 = arith.constant 3 : index
    %c0_31 = arith.constant 0 : index
    %c0_32 = arith.constant 0 : index
    %48 = vector.load %arg2[%c0_30, %c3, %c0_31, %c0_32] : memref<1x4x2x128xf32, #tpu.memory_space<vmem>>, vector<1x1x2x128xf32>
    %49 = vector.shape_cast %48 : vector<1x1x2x128xf32> to vector<2x128xf32>
    %c0_33 = arith.constant 0 : index
    %c3_34 = arith.constant 3 : index
    %50 = memref.load %arg3[%c0_33, %c3_34] : memref<3x4xf32, #tpu.memory_space<smem>>
    %51 = vector.broadcast %50 : f32 to vector<2x128xf32>
    %52 = arith.mulf %51, %49 : vector<2x128xf32>
    %53 = arith.addf %39, %52 : vector<2x128xf32>
    %c1_35 = arith.constant 1 : index
    %c3_36 = arith.constant 3 : index
    %54 = memref.load %arg3[%c1_35, %c3_36] : memref<3x4xf32, #tpu.memory_space<smem>>
    %55 = vector.broadcast %54 : f32 to vector<2x128xf32>
    %56 = arith.mulf %55, %49 : vector<2x128xf32>
    %57 = arith.addf %43, %56 : vector<2x128xf32>
    %c2_37 = arith.constant 2 : index
    %c3_38 = arith.constant 3 : index
    %58 = memref.load %arg3[%c2_37, %c3_38] : memref<3x4xf32, #tpu.memory_space<smem>>
    %59 = vector.broadcast %58 : f32 to vector<2x128xf32>
    %60 = arith.mulf %59, %49 : vector<2x128xf32>
    %61 = arith.addf %47, %60 : vector<2x128xf32>
    %c0_39 = arith.constant 0 : index
    %c0_40 = arith.constant 0 : index
    %c0_41 = arith.constant 0 : index
    %c0_42 = arith.constant 0 : index
    %62 = vector.load %arg5[%c0_39, %c0_40, %c0_41, %c0_42] : memref<1x3x2x128xf32, #tpu.memory_space<vmem>>, vector<1x1x2x128xf32>
    %63 = vector.shape_cast %62 : vector<1x1x2x128xf32> to vector<2x128xf32>
    %64 = vector.shape_cast %53 : vector<2x128xf32> to vector<1x1x2x128xf32>
    tpu.vector_store %arg5[%c0_39, %c0_40, %c0_41, %c0_42], %64 {strides = array<i32>} : memref<1x3x2x128xf32, #tpu.memory_space<vmem>>, vector<1x1x2x128xf32>,
    %c0_43 = arith.constant 0 : index
    %c1_44 = arith.constant 1 : index
    %c0_45 = arith.constant 0 : index
    %c0_46 = arith.constant 0 : index
    %65 = vector.load %arg5[%c0_43, %c1_44, %c0_45, %c0_46] : memref<1x3x2x128xf32, #tpu.memory_space<vmem>>, vector<1x1x2x128xf32>
    %66 = vector.shape_cast %65 : vector<1x1x2x128xf32> to vector<2x128xf32>
    %67 = vector.shape_cast %57 : vector<2x128xf32> to vector<1x1x2x128xf32>
    tpu.vector_store %arg5[%c0_43, %c1_44, %c0_45, %c0_46], %67 {strides = array<i32>} : memref<1x3x2x128xf32, #tpu.memory_space<vmem>>, vector<1x1x2x128xf32>,
    %c0_47 = arith.constant 0 : index
    %c2_48 = arith.constant 2 : index
    %c0_49 = arith.constant 0 : index
    %c0_50 = arith.constant 0 : index
    %68 = vector.load %arg5[%c0_47, %c2_48, %c0_49, %c0_50] : memref<1x3x2x128xf32, #tpu.memory_space<vmem>>, vector<1x1x2x128xf32>
    %69 = vector.shape_cast %68 : vector<1x1x2x128xf32> to vector<2x128xf32>
    %70 = vector.shape_cast %61 : vector<2x128xf32> to vector<1x1x2x128xf32>
    tpu.vector_store %arg5[%c0_47, %c2_48, %c0_49, %c0_50], %70 {strides = array<i32>} : memref<1x3x2x128xf32, #tpu.memory_space<vmem>>, vector<1x1x2x128xf32>,
    return
  }
  func.func @transform_0(%arg0: i32, %arg1: i32) -> (i32, i32, i32, i32) {
    %c0_i32 = arith.constant 0 : i32
    %c0_i32_0 = arith.constant 0 : i32
    %c0_i32_1 = arith.constant 0 : i32
    return %arg0, %c0_i32, %arg1, %c0_i32_0 : i32, i32, i32, i32
  }
  func.func @transform_1(%arg0: i32, %arg1: i32) -> (i32, i32) {
    %c0_i32 = arith.constant 0 : i32
    %c0_i32_0 = arith.constant 0 : i32
    %c0_i32_1 = arith.constant 0 : i32
    return %c0_i32, %c0_i32_0 : i32, i32
  }
  func.func @transform_2(%arg0: i32, %arg1: i32) -> i32 {
    %c0_i32 = arith.constant 0 : i32
    %c0_i32_0 = arith.constant 0 : i32
    return %c0_i32 : i32
  }
  func.func @transform_3(%arg0: i32, %arg1: i32) -> (i32, i32, i32, i32) {
    %c0_i32 = arith.constant 0 : i32
    %c0_i32_0 = arith.constant 0 : i32
    %c0_i32_1 = arith.constant 0 : i32
    return %arg0, %c0_i32, %arg1, %c0_i32_0 : i32, i32, i32, i32
  }
}

</mosaic_0001>

<llo_original>
// kernel: tpu_custom_call.1
$region0: #{tpu_custom_call.1}
  #allocation0 [shape = 'u32[]', space=smem, size = 0x4, offset = 0x4, fixed_abs, tag = 'smem constant byte address 0x4 - core index']
  #allocation1 [shape = 'u32[144,128]{1,0:T(1,128)}', space=vmem, size = 0x12000, scoped, tag = 'internal scratch']
  %s0 = inlined_call_operand.hbm [shape: f32[2,4,2,128], index: 0, kind: input, shape index: {}]
  %s1 = inlined_call_operand.hbm [shape: f32[3,4], index: 1, kind: input, shape index: {}]
  %s2 = inlined_call_operand.vmem [shape: f32[3], index: 2, kind: input, shape index: {}]
  %s3 = inlined_call_operand.hbm [shape: f32[2,3,2,128], index: 3, kind: output, shape index: {}]
  %s4 = sld [smem:[#allocation0]]
  $region57: #{tpu_custom_call.1} parent=0
    _
  %s6 = ssub.s32 1, %s4
  %s7 = scalar_select 0, %s6, %s4
  $region1: #{tpu_custom_call.1} parent=0
    #allocation2 [shape = 'u8[8192]{0}', space=vmem, size = 0x2000, scoped, tag = 'input window, operand 0']
    #allocation3 [shape = 's32[2]{0}', space=sflag, size = 0x8, scoped, tag = 'scoped memory for tpu_custom_call.1']
    #allocation4 [shape = 's32[2]{0}', space=sflag, size = 0x8, scoped, tag = 'scoped memory for tpu_custom_call.1']
    #allocation5 [shape = 's32[2]{0}', space=sflag, size = 0x8, scoped, tag = 'scoped memory for tpu_custom_call.1']
    #allocation6 [shape = 's32[2]{0}', space=sflag, size = 0x8, scoped, tag = 'scoped memory for tpu_custom_call.1']
    #allocation7 [shape = 'u8[2048]{0}', space=smem, size = 0x800, scoped, tag = 'input window, operand 1, single buffered']
    #allocation8 [shape = 'u8[512]{0}', space=smem, size = 0x200, scoped, tag = 'input window, operand 2, single buffered']
    #allocation9 [shape = 'u8[6144]{0}', space=vmem, size = 0x1800, scoped, tag = 'output window, operand 0']
    %8 = vsyncpa [#allocation3], 0
    %s9 = scalar_lea.sflag [#allocation3], 1
    %10 = vsyncpa %s9, 0
    %11 = vsyncpa [#allocation5], 0
    %12 = vsyncpa [#allocation6], 0
    %13 = vsyncpa [#allocation4], 0
    %s14 = scalar_lea.sflag [#allocation4], 1
    %15 = vsyncpa %s14, 0
    loop: start=0, step=1, limit=4
    $region2: #{tpu_custom_call.1} parent=1 // loop_pre_header
      _
    $region3: #{tpu_custom_call.1} parent=1 // loop_header
      %s17 = sphi 0, %s21
      %p18 = scmp.ge.s32.totalorder %s17, 4
      %s24 = sphi 0, %s36
      %s25 = sphi 0, %s32
      %s26 = sphi 0, %s24
      %s27 = sphi 0, %s25
      %s28 = sphi 0, %s26
      %s29 = sphi 0, %s27
      %s41 = sphi 0, %s43
      %s44 = sphi 0, %s41
      %s45 = sphi 0, %s44
      %s61 = sphi 0, %s45
      %s65 = sphi 0, %s65
      %s67 = sphi 0, %s65
      %s68 = sphi 0, %s67
      %s82 = sphi 0, %s68
      %s86 = sphi 0, %s86
      %s88 = sphi 0, %s86
      %s89 = sphi 0, %s88
      %s103 = sphi 0, %s89
      %s111 = sphi 0, %s113
      %s114 = sphi 0, %s111
      %s115 = sphi 0, %s114
      %s131 = sphi 0, %s115
    $region4: #{tpu_custom_call.1} parent=1 // loop_header_branch
      %20 = sbr.rel (%p18) target = $region8
    $region5: #{tpu_custom_call.1} parent=1 // loop_body
      %s22 = ssub.s32 %s17, 1
      %s23 = ssub.s32 %s17, 2
      %s30 = sadd.s32 1, %s25
      %p31 = scmp.ge.s32.totalorder %s30, 1
      %s32 = scalar_select %p31, 0, %s30
      %s33 = sadd.s32 1, %s24
      %s34 = scalar_select %p31, %s33, %s24
      %p35 = scmp.ge.s32.totalorder %s34, 2
      %s36 = scalar_select %p35, 0, %s34
      %s37 = ssub.s32 %s24, %s36
      %s38 = ssub.s32 %s25, %s32
      %s39 = sor.u32 %s37, %s38
      %p40 = scmp.eq.s32.totalorder %s39, 0
      %s42 = sadd.s32 %s41, 1
      %s43 = scalar_select %p40, %s41, %s42
      %p46 = pneg %p40
      %p47 = scmp.eq.s32.totalorder %s17, 1
      %p48 = por %p46, %p47
      %p49 = scmp.ne.s32.totalorder %s41, %s44
      %p50 = scmp.eq.s32.totalorder %s17, 0
      %p51 = por %p49, %p50
      %p52 = scmp.ne.s32.totalorder %s41, %s44
      %p53 = scmp.eq.s32.totalorder %s22, 1
      %p54 = por %p52, %p53
      %p55 = scmp.ne.s32.totalorder %s44, %s45
      %p56 = scmp.eq.s32.totalorder %s22, 0
      %p57 = por %p55, %p56
      %p58 = scmp.ne.s32.totalorder %s44, %s45
      %p59 = scmp.eq.s32.totalorder %s23, 1
      %p60 = por %p58, %p59
      %p62 = scmp.ne.s32.totalorder %s45, %s61
      %p63 = scmp.eq.s32.totalorder %s23, 0
      %p64 = por %p62, %p63
      %s66 = sadd.s32 %s65, 1
      %p69 = scmp.eq.s32.totalorder %s17, 1
      %p70 = scmp.ne.s32.totalorder %s65, %s67
      %p71 = scmp.eq.s32.totalorder %s17, 0
      %p72 = por %p70, %p71
      %p73 = scmp.ne.s32.totalorder %s65, %s67
      %p74 = scmp.eq.s32.totalorder %s22, 1
      %p75 = por %p73, %p74
      %p76 = scmp.ne.s32.totalorder %s67, %s68
      %p77 = scmp.eq.s32.totalorder %s22, 0
      %p78 = por %p76, %p77
      %p79 = scmp.ne.s32.totalorder %s67, %s68
      %p80 = scmp.eq.s32.totalorder %s23, 1
      %p81 = por %p79, %p80
      %p83 = scmp.ne.s32.totalorder %s68, %s82
      %p84 = scmp.eq.s32.totalorder %s23, 0
      %p85 = por %p83, %p84
      %s87 = sadd.s32 %s86, 1
      %p90 = scmp.eq.s32.totalorder %s17, 1
      %p91 = scmp.ne.s32.totalorder %s86, %s88
      %p92 = scmp.eq.s32.totalorder %s17, 0
      %p93 = por %p91, %p92
      %p94 = scmp.ne.s32.totalorder %s86, %s88
      %p95 = scmp.eq.s32.totalorder %s22, 1
      %p96 = por %p94, %p95
      %p97 = scmp.ne.s32.totalorder %s88, %s89
      %p98 = scmp.eq.s32.totalorder %s22, 0
      %p99 = por %p97, %p98
      %p100 = scmp.ne.s32.totalorder %s88, %s89
      %p101 = scmp.eq.s32.totalorder %s23, 1
      %p102 = por %p100, %p101
      %p104 = scmp.ne.s32.totalorder %s89, %s103
      %p105 = scmp.eq.s32.totalorder %s23, 0
      %p106 = por %p104, %p105
      %s107 = ssub.s32 %s24, %s36
      %s108 = ssub.s32 %s25, %s32
      %s109 = sor.u32 %s107, %s108
      %p110 = scmp.eq.s32.totalorder %s109, 0
      %s112 = sadd.s32 %s111, 1
      %s113 = scalar_select %p110, %s111, %s112
      %p116 = pneg %p110
      %p117 = scmp.eq.s32.totalorder %s17, 1
      %p118 = por %p116, %p117
      %p119 = scmp.ne.s32.totalorder %s111, %s114
      %p120 = scmp.eq.s32.totalorder %s17, 0
      %p121 = por %p119, %p120
      %p122 = scmp.ne.s32.totalorder %s111, %s114
      %p123 = scmp.eq.s32.totalorder %s22, 1
      %p124 = por %p122, %p123
      %p125 = scmp.ne.s32.totalorder %s114, %s115
      %p126 = scmp.eq.s32.totalorder %s22, 0
      %p127 = por %p125, %p126
      %p128 = scmp.ne.s32.totalorder %s114, %s115
      %p129 = scmp.eq.s32.totalorder %s23, 1
      %p130 = por %p128, %p129
      %p132 = scmp.ne.s32.totalorder %s115, %s131
      %p133 = scmp.eq.s32.totalorder %s23, 0
      %p134 = por %p132, %p133
      %p135 = scmp.le.s32.totalorder 1, %s17
      %p136 = scmp.lt.s32.totalorder %s17, 3
      %p137 = pnand %p135, %p136
      %p138 = pneg %p137
      // Predicated region
      $region9: #{tpu_custom_call.1} parent=5 // pred_check
        _
      $region10: #{tpu_custom_call.1} parent=5 // pred_check_branch
        %140 = sbr.rel (%p137) target = $region12
      $region11: #{tpu_custom_call.1} parent=5 // pred_region
        %s141 = ssub.s32 %s17, 1
        // Predicated region
        $region13: #{tpu_custom_call.1} parent=11 // pred_check
          %p142 = pneg %p78
        $region14: #{tpu_custom_call.1} parent=11 // pred_check_branch
          %144 = sbr.rel (%p142) target = $region16
        $region15: #{tpu_custom_call.1} parent=11 // pred_region
          %s146 = ssub.s32 64, 64
          %147 = vsyncadd [#allocation5], %s146
          %150 = dma.hbm_to_smem %s1, 64, [#allocation7], [#allocation5]
        $region16: #{tpu_custom_call.1} parent=11 // pred_fallthru
          _
        // Predicated region
        $region17: #{tpu_custom_call.1} parent=11 // pred_check
          %p151 = pneg %p99
        $region18: #{tpu_custom_call.1} parent=11 // pred_check_branch
          %153 = sbr.rel (%p151) target = $region20
        $region19: #{tpu_custom_call.1} parent=11 // pred_region
          %s155 = ssub.s32 16, 16
          %156 = vsyncadd [#allocation6], %s155
          %s158 = sshll.u32 %s2, 4
          %s159 = int_to_ptr.vmem [resolvable:$true] %s158
          %161 = dma.vmem_to_smem %s159, 16, [#allocation8], [#allocation6]
        $region20: #{tpu_custom_call.1} parent=11 // pred_fallthru
          _
      $region12: #{tpu_custom_call.1} parent=5 // pred_fallthru
        _
      %p162 = scmp.lt.s32.totalorder %s17, 2
      // Predicated region
      $region21: #{tpu_custom_call.1} parent=5 // pred_check
        %p163 = pneg %p162
      $region22: #{tpu_custom_call.1} parent=5 // pred_check_branch
        %165 = sbr.rel (%p163) target = $region24
      $region23: #{tpu_custom_call.1} parent=5 // pred_region
        // Predicated region
        $region25: #{tpu_custom_call.1} parent=23 // pred_check
          %p166 = pneg %p51
        $region26: #{tpu_custom_call.1} parent=23 // pred_check_branch
          %168 = sbr.rel (%p166) target = $region28
        $region27: #{tpu_custom_call.1} parent=23 // pred_region
          %s169 = sand.u32 %s41, 1
          %s170 = scalar_lea.sflag [#allocation3], %s169
          %s171 = sand.u32 %s41, 1
          %s172 = smul.addr %s171, 8
          %s173 = scalar_lea.vmem [#allocation2], %s172
          %s175 = ssub.s32 128, 128
          %176 = vsyncadd %s170, %s175
          %s177 = smul.addr %s24, 4
          %s178 = sadd.s32 %s25, %s177
          %s179 = smul.addr %s178, 32
          %s180 = scalar_lea.hbm %s0, %s179
          %s181 = sshll.u32 %s173, 4
          %s182 = int_to_ptr.vmem [resolvable:$true] %s181
          %187 = dma.hbm_to_vmem [thread:$0]  %s180, 128, %s182, %s170, 32, 32, 2
        $region28: #{tpu_custom_call.1} parent=23 // pred_fallthru
          _
      $region24: #{tpu_custom_call.1} parent=5 // pred_fallthru
        _
      %p188 = scmp.le.s32.totalorder 1, %s17
      %p189 = scmp.lt.s32.totalorder %s17, 3
      %p190 = pnand %p188, %p189
      %p191 = pneg %p190
      // Predicated region
      $region29: #{tpu_custom_call.1} parent=5 // pred_check
        _
      $region30: #{tpu_custom_call.1} parent=5 // pred_check_branch
        %193 = sbr.rel (%p190) target = $region32
      $region31: #{tpu_custom_call.1} parent=5 // pred_region
        %s194 = ssub.s32 %s17, 1
        %s195 = sand.u32 %s44, 1
        %s196 = scalar_lea.sflag [#allocation3], %s195
        %s197 = sand.u32 %s44, 1
        %s198 = smul.addr %s197, 8
        %s199 = scalar_lea.vmem [#allocation2], %s198
        // Predicated region
        $region33: #{tpu_custom_call.1} parent=31 // pred_check
          %p200 = pneg %p57
        $region34: #{tpu_custom_call.1} parent=31 // pred_check_branch
          %202 = sbr.rel (%p200) target = $region36
        $region35: #{tpu_custom_call.1} parent=31 // pred_region
          %203 = dma.done %s196, 128
        $region36: #{tpu_custom_call.1} parent=31 // pred_fallthru
          _
        // Predicated region
        $region37: #{tpu_custom_call.1} parent=31 // pred_check
          %p204 = pneg %p78
        $region38: #{tpu_custom_call.1} parent=31 // pred_check_branch
          %206 = sbr.rel (%p204) target = $region40
        $region39: #{tpu_custom_call.1} parent=31 // pred_region
          %207 = dma.done [#allocation5], 64
        $region40: #{tpu_custom_call.1} parent=31 // pred_fallthru
          _
        // Predicated region
        $region41: #{tpu_custom_call.1} parent=31 // pred_check
          %p208 = pneg %p99
        $region42: #{tpu_custom_call.1} parent=31 // pred_check_branch
          %210 = sbr.rel (%p208) target = $region44
        $region43: #{tpu_custom_call.1} parent=31 // pred_region
          %211 = dma.done [#allocation6], 16
        $region44: #{tpu_custom_call.1} parent=31 // pred_fallthru
          _
        %212 = sfence
        %s213 = sand.u32 %s44, 1
        %s214 = scalar_lea.sflag [#allocation3], %s213
        %s215 = sand.u32 %s44, 1
        %s216 = smul.addr %s215, 8
        %s217 = scalar_lea.vmem [#allocation2], %s216
        %p218 = pneg %p57
        %p219 = pneg %p54
        %p220 = pneg %p78
        %p221 = pneg %p75
        %p222 = pneg %p99
        %p223 = pneg %p96
        %p224 = pneg %p127
        %p225 = pneg %p124
        %s226 = sand.u32 %s114, 1
        %s227 = scalar_lea.sflag [#allocation4], %s226
        %s228 = sand.u32 %s114, 1
        %s229 = smul.addr %s228, 6
        %s230 = scalar_lea.vmem [#allocation9], %s229
        %v231 = vld [vmem:[%s199] sm:$0x3]
        %s232 = sld [smem:[#allocation7]]
        %v233 = vstv %s232
        %v234 = vmul.f32 %v233, %v231
        %s235 = sld [smem:[#allocation8]]
        %v236 = vstv %s235
        %v237 = vadd.f32 %v234, %v236
        %s238 = sld [smem:[#allocation7 + $0x80]]
        %v239 = vstv %s238
        %v240 = vmul.f32 %v239, %v231
        %s241 = sld [smem:[#allocation8 + $0x1]]
        %v242 = vstv %s241
        %v243 = vadd.f32 %v240, %v242
        %s244 = sld [smem:[#allocation7 + $0x100]]
        %v245 = vstv %s244
        %v246 = vmul.f32 %v245, %v231
        %s247 = sld [smem:[#allocation8 + $0x2]]
        %v248 = vstv %s247
        %v249 = vadd.f32 %v246, %v248
        %s250 = scalar_lea.vmem %s199, 2 [#allocation2]
        %v251 = vld [vmem:[%s250] sm:$0x3]
        %s252 = sld [smem:[#allocation7 + $0x1]]
        %v253 = vstv %s252
        %v254 = vmul.f32 %v253, %v251
        %v255 = vadd.f32 %v237, %v254
        %s256 = sld [smem:[#allocation7 + $0x81]]
        %v257 = vstv %s256
        %v258 = vmul.f32 %v257, %v251
        %v259 = vadd.f32 %v243, %v258
        %s260 = sld [smem:[#allocation7 + $0x101]]
        %v261 = vstv %s260
        %v262 = vmul.f32 %v261, %v251
        %v263 = vadd.f32 %v249, %v262
        %s264 = scalar_lea.vmem %s199, 4 [#allocation2]
        %v265 = vld [vmem:[%s264] sm:$0x3]
        %s266 = sld [smem:[#allocation7 + $0x2]]
        %v267 = vstv %s266
        %v268 = vmul.f32 %v267, %v265
        %v269 = vadd.f32 %v255, %v268
        %s270 = sld [smem:[#allocation7 + $0x82]]
        %v271 = vstv %s270
        %v272 = vmul.f32 %v271, %v265
        %v273 = vadd.f32 %v259, %v272
        %s274 = sld [smem:[#allocation7 + $0x102]]
        %v275 = vstv %s274
        %v276 = vmul.f32 %v275, %v265
        %v277 = vadd.f32 %v263, %v276
        %s278 = scalar_lea.vmem %s199, 6 [#allocation2]
        %v279 = vld [vmem:[%s278] sm:$0x3]
        %s280 = sld [smem:[#allocation7 + $0x3]]
        %v281 = vstv %s280
        %v282 = vmul.f32 %v281, %v279
        %v283 = vadd.f32 %v269, %v282
        %s284 = sld [smem:[#allocation7 + $0x83]]
        %v285 = vstv %s284
        %v286 = vmul.f32 %v285, %v279
        %v287 = vadd.f32 %v273, %v286
        %s288 = sld [smem:[#allocation7 + $0x103]]
        %v289 = vstv %s288
        %v290 = vmul.f32 %v289, %v279
        %v291 = vadd.f32 %v277, %v290
        %292 = vst [vmem:[%s230] sm:$0x3] %v283
        %s293 = scalar_lea.vmem %s230, 2 [#allocation9]
        %294 = vst [vmem:[%s293] sm:$0x3] %v287
        %s295 = scalar_lea.vmem %s230, 4 [#allocation9]
        %296 = vst [vmem:[%s295] sm:$0x3] %v291
        %s297 = sand.u32 %s114, 1
        %s298 = scalar_lea.sflag [#allocation4], %s297
        %s299 = sand.u32 %s114, 1
        %s300 = smul.addr %s299, 6
        %s301 = scalar_lea.vmem [#allocation9], %s300
        // Predicated region
        $region45: #{tpu_custom_call.1} parent=31 // pred_check
          %p302 = pneg %p124
        $region46: #{tpu_custom_call.1} parent=31 // pred_check_branch
          %304 = sbr.rel (%p302) target = $region48
        $region47: #{tpu_custom_call.1} parent=31 // pred_region
          %s306 = ssub.s32 96, 96
          %307 = vsyncadd %s298, %s306
          %s308 = smul.addr %s26, 3
          %s309 = sadd.s32 %s27, %s308
          %s310 = smul.addr %s309, 32
          %s311 = scalar_lea.hbm %s3, %s310
          %s312 = sshll.u32 %s301, 4
          %s313 = int_to_ptr.vmem [resolvable:$true] %s312
          %318 = dma.vmem_to_hbm [thread:$0]  %s313, 96, %s311, %s298, 32, 32, 2
        $region48: #{tpu_custom_call.1} parent=31 // pred_fallthru
          _
      $region32: #{tpu_custom_call.1} parent=5 // pred_fallthru
        _
      %p319 = scmp.le.s32.totalorder 2, %s17
      // Predicated region
      $region49: #{tpu_custom_call.1} parent=5 // pred_check
        %p320 = pneg %p319
      $region50: #{tpu_custom_call.1} parent=5 // pred_check_branch
        %322 = sbr.rel (%p320) target = $region52
      $region51: #{tpu_custom_call.1} parent=5 // pred_region
        %s323 = ssub.s32 %s17, 2
        // Predicated region
        $region53: #{tpu_custom_call.1} parent=51 // pred_check
          %p324 = pneg %p130
        $region54: #{tpu_custom_call.1} parent=51 // pred_check_branch
          %326 = sbr.rel (%p324) target = $region56
        $region55: #{tpu_custom_call.1} parent=51 // pred_region
          %s327 = sand.u32 %s115, 1
          %s328 = scalar_lea.sflag [#allocation4], %s327
          %s329 = sand.u32 %s115, 1
          %s330 = smul.addr %s329, 6
          %s331 = scalar_lea.vmem [#allocation9], %s330
          %332 = dma.done %s328, 96
        $region56: #{tpu_custom_call.1} parent=51 // pred_fallthru
          _
      $region52: #{tpu_custom_call.1} parent=5 // pred_fallthru
        _
    $region6: #{tpu_custom_call.1} parent=1 // loop_footer
      %s21 = sadd.s32 1, %s17
    $region7: #{tpu_custom_call.1} parent=1 // loop_footer_branch
      %16 = sbr.rel target = $region3
    $region8: #{tpu_custom_call.1} parent=1 // loop_exit
      _
    %333 = vsyncpa [#allocation3], 1
    %s334 = scalar_lea.sflag [#allocation3], 1
    %335 = vsyncpa %s334, 1
    %336 = vsyncpa [#allocation4], 1
    %s337 = scalar_lea.sflag [#allocation4], 1
    %338 = vsyncpa %s337, 1
    %339 = vsyncpa [#allocation5], 1
    %s340 = scalar_lea.sflag [#allocation5], 1
    %341 = vsyncpa %s340, 1
    %342 = vsyncpa [#allocation6], 1
    %s343 = scalar_lea.sflag [#allocation6], 1
    %344 = vsyncpa %s343, 1

</llo_original>
